<compile_context>
chip_gen: v5e
topology: v5e:2x2
jax: 0.10.0
libtpu: 0.0.40
codegen_flags: <defaults>
</compile_context>

<pallas_src>
import functools
import math

import jax
import jax.numpy as jnp
from jax.experimental import pallas as pl
from jax.experimental.pallas import tpu as pltpu


# ---------------------------------------------------------------------------
# Tiling helpers
# ---------------------------------------------------------------------------
def _pick_tile(n, target, multiple):
    """Largest divisor of n that is <= target and a multiple of `multiple`.

    Falls back to the full dimension (always a legal block shape)."""
    if n <= target:
        return n
    start = (target // multiple) * multiple
    for cand in range(start, multiple - 1, -multiple):
        if n % cand == 0:
            return cand
    # TODO(synk): pad/mask the tail instead of a full-dimension fallback.
    return n


def _heads_per_group(heads, head_dim):
    """Smallest head-group whose packed width (hg * head_dim) is lane-dense
    (a multiple of 128); falls back to all heads (block == full d_model)."""
    for hg in range(1, heads + 1):
        if heads % hg == 0 and (hg * head_dim) % 128 == 0:
            return hg
    return heads


def _compiler_params(dimension_semantics, vmem_limit_bytes):
    if vmem_limit_bytes is None:
        return pltpu.CompilerParams(dimension_semantics=dimension_semantics)
    return pltpu.CompilerParams(dimension_semantics=dimension_semantics,
                                vmem_limit_bytes=vmem_limit_bytes)


# ---------------------------------------------------------------------------
# Generic tiled linear kernel: y = x @ w + b  (weights pre-cast outside)
# ---------------------------------------------------------------------------
def _linear_kernel(x_ref, w_ref, b_ref, o_ref, *, compute_dtype):
    x = x_ref[...]
    if x.dtype != compute_dtype:
        x = x.astype(compute_dtype)
    y = jnp.dot(x, w_ref[...], preferred_element_type=jnp.float32)
    o_ref[...] = (y + b_ref[...]).astype(o_ref.dtype)


def _pallas_linear(x, w, b, *, out_dtype, compute_dtype, tm, tn, vmem_limit):
    B, L, Din = x.shape
    Dout = w.shape[1]
    TM = _pick_tile(L, tm, 8)
    TN = _pick_tile(Dout, tn, 128)
    kern = functools.partial(_linear_kernel, compute_dtype=compute_dtype)
    return pl.pallas_call(
        kern,
        out_shape=jax.ShapeDtypeStruct((B, L, Dout), out_dtype),
        grid=(B, L // TM, Dout // TN),
        in_specs=[
            pl.BlockSpec((None, TM, Din), lambda b, l, n: (b, l, 0)),
            pl.BlockSpec((Din, TN), lambda b, l, n: (0, n)),
            pl.BlockSpec((1, TN), lambda b, l, n: (0, n)),
        ],
        out_specs=pl.BlockSpec((None, TM, TN), lambda b, l, n: (b, l, n)),
        compiler_params=_compiler_params(("parallel",) * 3, vmem_limit),
    )(x, w, b)


# ---------------------------------------------------------------------------
# Fused Q/K/V projection (distinct q, k, v activations, matching shapes)
# ---------------------------------------------------------------------------
def _qkv_proj_kernel(q_ref, k_ref, v_ref, wq_ref, wk_ref, wv_ref,
                     bq_ref, bk_ref, bv_ref, qo_ref, ko_ref, vo_ref,
                     *, compute_dtype):
    def proj(x_ref, w_ref, b_ref, o_ref):
        x = x_ref[...]
        if x.dtype != compute_dtype:
            x = x.astype(compute_dtype)
        y = jnp.dot(x, w_ref[...], preferred_element_type=jnp.float32)
        o_ref[...] = (y + b_ref[...]).astype(o_ref.dtype)

    proj(q_ref, wq_ref, bq_ref, qo_ref)
    proj(k_ref, wk_ref, bk_ref, ko_ref)
    proj(v_ref, wv_ref, bv_ref, vo_ref)


def _pallas_qkv_proj(q, k, v, wq, wk, wv, bq, bk, bv, *, out_dtype,
                     compute_dtype, tm, tn, vmem_limit):
    B, L, Din = q.shape
    Dout = wq.shape[1]
    TM = _pick_tile(L, tm, 8)
    TN = _pick_tile(Dout, tn, 128)
    x_spec = pl.BlockSpec((None, TM, Din), lambda b, l, n: (b, l, 0))
    w_spec = pl.BlockSpec((Din, TN), lambda b, l, n: (0, n))
    b_spec = pl.BlockSpec((1, TN), lambda b, l, n: (0, n))
    o_spec = pl.BlockSpec((None, TM, TN), lambda b, l, n: (b, l, n))
    out = jax.ShapeDtypeStruct((B, L, Dout), out_dtype)
    kern = functools.partial(_qkv_proj_kernel, compute_dtype=compute_dtype)
    return pl.pallas_call(
        kern,
        out_shape=(out, out, out),
        grid=(B, L // TM, Dout // TN),
        in_specs=[x_spec, x_spec, x_spec,
                  w_spec, w_spec, w_spec,
                  b_spec, b_spec, b_spec],
        out_specs=(o_spec, o_spec, o_spec),
        compiler_params=_compiler_params(("parallel",) * 3, vmem_limit),
    )(q, k, v, wq, wk, wv, bq, bk, bv)


# ---------------------------------------------------------------------------
# Flash attention on (B, L, D) activations, head groups addressed by BlockSpec
# ---------------------------------------------------------------------------
def _flash_mha_kernel(q_ref, k_ref, v_ref, *rest, head_dim, heads_per_group,
                      use_mask, compute_dtype):
    if use_mask:
        mask_ref, o_ref, m_ref, l_ref, acc_ref = rest
    else:
        mask_ref = None
        o_ref, m_ref, l_ref, acc_ref = rest

    kv = pl.program_id(3)

    @pl.when(kv == 0)
    def _():
        m_ref[...] = jnp.full(m_ref.shape, -jnp.inf, dtype=m_ref.dtype)
        l_ref[...] = jnp.zeros(l_ref.shape, dtype=l_ref.dtype)
        acc_ref[...] = jnp.zeros(acc_ref.shape, dtype=acc_ref.dtype)

    q = q_ref[...]    # (TQ,  heads_per_group*head_dim), pre-scaled by 1/sqrt(hd)
    k = k_ref[...]    # (TKV, heads_per_group*head_dim)
    v = v_ref[...]    # (TKV, heads_per_group*head_dim)

    if use_mask:
        # Same additive semantics as the PyTorch module; computed once per
        # grid step and shared by every head in the group.
        bias = mask_ref[...] * jnp.float32(-1000000000000000.0)

    for h in range(heads_per_group):
        lo, hi = h * head_dim, (h + 1) * head_dim
        # QK^T: contract the last dim of both operands (no in-kernel transpose).
        s = jax.lax.dot_general(q[:, lo:hi], k[:, lo:hi],
                                (((1,), (1,)), ((), ())),
                                preferred_element_type=jnp.float32)  # (TQ, TKV)
        if use_mask:
            s = s + bias
        m_prev = m_ref[:, h:h + 1]
        m_new = jnp.maximum(m_prev, jnp.max(s, axis=-1, keepdims=True))
        alpha = jnp.exp(m_prev - m_new)
        p = jnp.exp(s - m_new)                               # f32 softmax numerator
        l_ref[:, h:h + 1] = alpha * l_ref[:, h:h + 1] + jnp.sum(
            p, axis=-1, keepdims=True)
        pv = jnp.dot(p.astype(compute_dtype), v[:, lo:hi],
                     preferred_element_type=jnp.float32)     # (TQ, head_dim)
        acc_ref[:, lo:hi] = alpha * acc_ref[:, lo:hi] + pv
        m_ref[:, h:h + 1] = m_new

    @pl.when(kv == pl.num_programs(3) - 1)
    def _():
        approx = jnp.dtype(compute_dtype) != jnp.dtype(jnp.float32)
        for h in range(heads_per_group):
            lo, hi = h * head_dim, (h + 1) * head_dim
            inv = pl.reciprocal(l_ref[:, h:h + 1], approx=approx)
            o_ref[:, lo:hi] = (acc_ref[:, lo:hi] * inv).astype(o_ref.dtype)


def _pallas_flash_mha(q, k, v, mask, *, heads, head_dim, compute_dtype,
                      tq, tkv, vmem_limit, packed=False):
    B, Lq = q.shape[0], q.shape[1]
    Lk = k.shape[1]
    D = heads * head_dim
    hg = _heads_per_group(heads, head_dim)
    GD = hg * head_dim
    n_groups = heads // hg
    TQ = _pick_tile(Lq, tq, 8)
    # The mask tile's last dim must be lane-aligned (or the full length).
    TKV = _pick_tile(Lk, tkv, 128 if mask is not None else 8)
    # Packed self-attention: q/k/v live in one (B, L, 3D) activation, so K and
    # V head groups are just offset block indices on the lane axis.
    k_off = n_groups if packed else 0
    v_off = 2 * n_groups if packed else 0

    in_specs = [
        pl.BlockSpec((None, TQ, GD), lambda b, g, qi, ki: (b, qi, g)),
        pl.BlockSpec((None, TKV, GD), lambda b, g, qi, ki: (b, ki, k_off + g)),
        pl.BlockSpec((None, TKV, GD), lambda b, g, qi, ki: (b, ki, v_off + g)),
    ]
    args = [q, k, v]
    if mask is not None:
        in_specs.append(pl.BlockSpec((TQ, TKV), lambda b, g, qi, ki: (qi, ki)))
        args.append(mask)

    kern = functools.partial(_flash_mha_kernel, head_dim=head_dim,
                             heads_per_group=hg, use_mask=mask is not None,
                             compute_dtype=compute_dtype)
    return pl.pallas_call(
        kern,
        out_shape=jax.ShapeDtypeStruct((B, Lq, D), compute_dtype),
        grid=(B, n_groups, Lq // TQ, Lk // TKV),
        in_specs=in_specs,
        out_specs=pl.BlockSpec((None, TQ, GD), lambda b, g, qi, ki: (b, qi, g)),
        scratch_shapes=[
            pltpu.VMEM((TQ, hg), jnp.float32),    # running max   (col per head)
            pltpu.VMEM((TQ, hg), jnp.float32),    # running denom (col per head)
            pltpu.VMEM((TQ, GD), jnp.float32),    # running output accumulator
        ],
        compiler_params=_compiler_params(
            ("parallel", "parallel", "parallel", "arbitrary"), vmem_limit),
    )(*args)


# ---------------------------------------------------------------------------
# Module wrapper
# ---------------------------------------------------------------------------
def init_mha_params(key, d_model):
    """Weights stored already transposed so y = x @ w + b matches PyTorch."""
    keys = jax.random.split(key, 8)
    scale = 1.0 / jnp.sqrt(jnp.float32(d_model))
    params = {}
    for name, kw_, kb_ in [("q", keys[0], keys[1]), ("k", keys[2], keys[3]),
                           ("v", keys[4], keys[5]), ("o", keys[6], keys[7])]:
        params[f"w{name}"] = jax.random.normal(kw_, (d_model, d_model),
                                               jnp.float32) * scale
        params[f"b{name}"] = jax.random.normal(kb_, (1, d_model),
                                               jnp.float32) * scale
    return params


def multi_head_attention(params, q, k, v, mask, heads, *,
                         compute_dtype=jnp.bfloat16,
                         tm=512, tn=512, tq=512, tkv=256,
                         vmem_limit_bytes=None):
    """Forward pass of the PyTorch MutltiHeadAttention module.

    compute_dtype: matmul-operand / intermediate-activation dtype (bf16 is
      MXU-native on v5e/v6e/v7x; use float32 for PyTorch-faithful numerics).
      Accumulation and the softmax are always float32.
    vmem_limit_bytes: optional scoped-VMEM raise (64-96 MiB on v5e/v6e when
      sweeping bigger tiles; keep near the 32 MiB default on v7x).
    """
    B, Lq, D = q.shape
    assert D % heads == 0, "d_model must be divisible by heads"
    hd = D // heads
    cd = jnp.dtype(compute_dtype)
    scale = 1.0 / math.sqrt(hd)

    # Cast weights once (outside the kernels) and fold the 1/sqrt(head_dim)
    # softmax scale into the Q projection (zero per-step cost in the kernels).
    wq = (params["wq"] * scale).astype(cd)
    bq = (params["bq"] * scale).astype(jnp.float32)
    wk = params["wk"].astype(cd)
    wv = params["wv"].astype(cd)
    wo = params["wo"].astype(cd)
    bk, bv, bo = params["bk"], params["bv"], params["bo"]

    if mask is not None:
        if mask.ndim != 2:
            # TODO(synk): support batched / per-head masks via extra BlockSpec axes.
            raise NotImplementedError("only 2-D (Lq, Lkv) masks are supported")
        mask = jnp.asarray(mask, jnp.float32)

    common = dict(compute_dtype=cd, tm=tm, tn=tn, vmem_limit=vmem_limit_bytes)

    if q is k and k is v:
        # Self-attention: one packed (D, 3D) weight -> a single wide dot per
        # step; the packed (B, L, 3D) output is sliced directly by the
        # attention BlockSpecs (no re-slicing HBM round trip).
        w_qkv = jnp.concatenate([wq, wk, wv], axis=1)
        b_qkv = jnp.concatenate([bq, bk, bv], axis=1)
        qkv = _pallas_linear(q, w_qkv, b_qkv, out_dtype=cd, **common)
        qw = kw = vw = qkv
        packed = True
    elif q.shape == k.shape == v.shape:
        # Distinct activations with matching shapes: one fused pallas_call.
        qw, kw, vw = _pallas_qkv_proj(q, k, v, wq, wk, wv, bq, bk, bv,
                                      out_dtype=cd, **common)
        packed = False
    else:
        # Cross-attention with differing lengths: separate tiled projections.
        qw = _pallas_linear(q, wq, bq, out_dtype=cd, **common)
        kw = _pallas_linear(k, wk, bk, out_dtype=cd, **common)
        vw = _pallas_linear(v, wv, bv, out_dtype=cd, **common)
        packed = False

    attn = _pallas_flash_mha(qw, kw, vw, mask, heads=heads, head_dim=hd,
                             compute_dtype=cd, tq=tq, tkv=tkv,
                             vmem_limit=vmem_limit_bytes, packed=packed)
    return _pallas_linear(attn, wo, bo, out_dtype=jnp.float32, **common)


# ---------------------------------------------------------------------------
# Pure-JAX reference (for correctness check)
# ---------------------------------------------------------------------------
def _reference_mha(params, q, k, v, mask, heads):
    B, Lq, D = q.shape
    hd = D // heads

    def split(x):
        b, l, _ = x.shape
        return x.reshape(b, l, heads, hd).transpose(0, 2, 1, 3)

    qh = split(q @ params["wq"] + params["bq"])
    kh = split(k @ params["wk"] + params["bk"])
    vh = split(v @ params["wv"] + params["bv"])
    s = jnp.einsum("bhqd,bhkd->bhqk", qh, kh) / jnp.sqrt(jnp.float32(hd))
    if mask is not None:
        s = s + mask * (-1000000000000000.0)
    w = jax.nn.softmax(s, axis=-1)
    o = jnp.einsum("bhqk,bhkd->bhqd", w, vh)
    o = o.transpose(0, 2, 1, 3).reshape(B, Lq, D)
    return o @ params["wo"] + params["bo"]


if __name__ == "__main__":
    B, L, D, H = 2, 8, 32, 4

    key = jax.random.PRNGKey(0)
    kp, kq, kk, kv = jax.random.split(key, 4)

    params = init_mha_params(kp, D)
    q = jax.random.normal(kq, (B, L, D), jnp.float32)
    k = jax.random.normal(kk, (B, L, D), jnp.float32)
    v = jax.random.normal(kv, (B, L, D), jnp.float32)

    # causal-style additive mask: 1.0 where attention is blocked, 0.0 where allowed
    mask = jnp.triu(jnp.ones((L, L), jnp.float32), k=1)

    with jax.default_matmul_precision("highest"):
        ref = jax.block_until_ready(_reference_mha(params, q, k, v, mask, H))
        ref_nomask = jax.block_until_ready(_reference_mha(params, q, k, v, None, H))
        ref_self = jax.block_until_ready(_reference_mha(params, q, q, q, mask, H))

    # f32-operand path: faithful to the PyTorch module numerics.
    out_f32 = jax.block_until_ready(
        multi_head_attention(params, q, k, v, mask, H, compute_dtype=jnp.float32))
    assert out_f32.shape == (B, L, D)
    assert jnp.allclose(out_f32, ref, atol=2e-3, rtol=2e-3), "f32 path mismatch"

    # mask=None path (module skips masking entirely; no zeros-mask materialized).
    out_nomask = jax.block_until_ready(
        multi_head_attention(params, q, k, v, None, H, compute_dtype=jnp.float32))
    assert jnp.allclose(out_nomask, ref_nomask, atol=2e-3, rtol=2e-3), \
        "no-mask path mismatch"

    # self-attention path (packed (D, 3D) QKV weight + packed attention specs).
    out_self = jax.block_until_ready(
        multi_head_attention(params, q, q, q, mask, H, compute_dtype=jnp.float32))
    assert jnp.allclose(out_self, ref_self, atol=2e-3, rtol=2e-3), \
        "self-attention (packed QKV) path mismatch"

    # bf16-operand path (f32 accumulation / f32 softmax): looser tolerance.
    out_bf16 = jax.block_until_ready(
        multi_head_attention(params, q, k, v, mask, H, compute_dtype=jnp.bfloat16))
    assert out_bf16.shape == (B, L, D)
    assert jnp.allclose(out_bf16, ref, atol=3e-1, rtol=1e-1), "bf16 path mismatch"

    print("KERNEL_OK")
</pallas_src>

<mosaic_0001>
module attributes {stable_mosaic.version = 11 : i64} {
  func.func @_qkv_proj_kernel(%arg0: i32, %arg1: i32, %arg2: i32, %arg3: memref<1x8x32xf32, #tpu.memory_space<vmem>>, %arg4: memref<1x8x32xf32, #tpu.memory_space<vmem>>, %arg5: memref<1x8x32xf32, #tpu.memory_space<vmem>>, %arg6: memref<32x32xf32, #tpu.memory_space<vmem>>, %arg7: memref<32x32xf32, #tpu.memory_space<vmem>>, %arg8: memref<32x32xf32, #tpu.memory_space<vmem>>, %arg9: memref<1x32xf32, #tpu.memory_space<vmem>>, %arg10: memref<1x32xf32, #tpu.memory_space<vmem>>, %arg11: memref<1x32xf32, #tpu.memory_space<vmem>>, %arg12: memref<1x8x32xf32, #tpu.memory_space<vmem>>, %arg13: memref<1x8x32xf32, #tpu.memory_space<vmem>>, %arg14: memref<1x8x32xf32, #tpu.memory_space<vmem>>) attributes {dimension_semantics = [#tpu.dimension_semantics<parallel>, #tpu.dimension_semantics<parallel>, #tpu.dimension_semantics<parallel>], iteration_bounds = array<i64: 2, 1, 1>, scalar_prefetch = 0 : i64, scratch_operands = 0 : i64, tpu.core_type = #tpu.core_type<tc>, window_params = [{transform_indices = @transform_0, window_bounds = array<i64: 1, 8, 32>}, {transform_indices = @transform_1, window_bounds = array<i64: 1, 8, 32>}, {transform_indices = @transform_2, window_bounds = array<i64: 1, 8, 32>}, {transform_indices = @transform_3, window_bounds = array<i64: 32, 32>}, {transform_indices = @transform_4, window_bounds = array<i64: 32, 32>}, {transform_indices = @transform_5, window_bounds = array<i64: 32, 32>}, {transform_indices = @transform_6, window_bounds = array<i64: 1, 32>}, {transform_indices = @transform_7, window_bounds = array<i64: 1, 32>}, {transform_indices = @transform_8, window_bounds = array<i64: 1, 32>}, {transform_indices = @transform_9, window_bounds = array<i64: 1, 8, 32>}, {transform_indices = @transform_10, window_bounds = array<i64: 1, 8, 32>}, {transform_indices = @transform_11, window_bounds = array<i64: 1, 8, 32>}]} {
    %c0 = arith.constant 0 : index
    %c0_0 = arith.constant 0 : index
    %c0_1 = arith.constant 0 : index
    %0 = vector.load %arg3[%c0, %c0_0, %c0_1] : memref<1x8x32xf32, #tpu.memory_space<vmem>>, vector<1x8x32xf32>
    %1 = vector.shape_cast %0 : vector<1x8x32xf32> to vector<8x32xf32>
    %c0_2 = arith.constant 0 : index
    %c0_3 = arith.constant 0 : index
    %2 = vector.load %arg6[%c0_2, %c0_3] : memref<32x32xf32, #tpu.memory_space<vmem>>, vector<32x32xf32>
    %cst = arith.constant dense<0.000000e+00> : vector<8x32xf32>
    %3 = tpu.matmul %1, %2, %cst {dimension_numbers = #tpu.dot_dimension_numbers<[1], [0], [0], [1], [0, 0, 1, 1], [], []>} : vector<8x32xf32>, vector<32x32xf32>, vector<8x32xf32> -> vector<8x32xf32>
    %c0_4 = arith.constant 0 : index
    %c0_5 = arith.constant 0 : index
    %4 = vector.load %arg9[%c0_4, %c0_5] : memref<1x32xf32, #tpu.memory_space<vmem>>, vector<1x32xf32>
    %5 = vector.broadcast %4 : vector<1x32xf32> to vector<8x32xf32>
    %6 = arith.addf %3, %5 : vector<8x32xf32>
    %c0_6 = arith.constant 0 : index
    %c0_7 = arith.constant 0 : index
    %c0_8 = arith.constant 0 : index
    %7 = vector.load %arg12[%c0_6, %c0_7, %c0_8] : memref<1x8x32xf32, #tpu.memory_space<vmem>>, vector<1x8x32xf32>
    %8 = vector.shape_cast %7 : vector<1x8x32xf32> to vector<8x32xf32>
    %9 = vector.shape_cast %6 : vector<8x32xf32> to vector<1x8x32xf32>
    tpu.vector_store %arg12[%c0_6, %c0_7, %c0_8], %9 {strides = array<i32>} : memref<1x8x32xf32, #tpu.memory_space<vmem>>, vector<1x8x32xf32>,
    %c0_9 = arith.constant 0 : index
    %c0_10 = arith.constant 0 : index
    %c0_11 = arith.constant 0 : index
    %10 = vector.load %arg4[%c0_9, %c0_10, %c0_11] : memref<1x8x32xf32, #tpu.memory_space<vmem>>, vector<1x8x32xf32>
    %11 = vector.shape_cast %10 : vector<1x8x32xf32> to vector<8x32xf32>
    %c0_12 = arith.constant 0 : index
    %c0_13 = arith.constant 0 : index
    %12 = vector.load %arg7[%c0_12, %c0_13] : memref<32x32xf32, #tpu.memory_space<vmem>>, vector<32x32xf32>
    %cst_14 = arith.constant dense<0.000000e+00> : vector<8x32xf32>
    %13 = tpu.matmul %11, %12, %cst_14 {dimension_numbers = #tpu.dot_dimension_numbers<[1], [0], [0], [1], [0, 0, 1, 1], [], []>} : vector<8x32xf32>, vector<32x32xf32>, vector<8x32xf32> -> vector<8x32xf32>
    %c0_15 = arith.constant 0 : index
    %c0_16 = arith.constant 0 : index
    %14 = vector.load %arg10[%c0_15, %c0_16] : memref<1x32xf32, #tpu.memory_space<vmem>>, vector<1x32xf32>
    %15 = vector.broadcast %14 : vector<1x32xf32> to vector<8x32xf32>
    %16 = arith.addf %13, %15 : vector<8x32xf32>
    %c0_17 = arith.constant 0 : index
    %c0_18 = arith.constant 0 : index
    %c0_19 = arith.constant 0 : index
    %17 = vector.load %arg13[%c0_17, %c0_18, %c0_19] : memref<1x8x32xf32, #tpu.memory_space<vmem>>, vector<1x8x32xf32>
    %18 = vector.shape_cast %17 : vector<1x8x32xf32> to vector<8x32xf32>
    %19 = vector.shape_cast %16 : vector<8x32xf32> to vector<1x8x32xf32>
    tpu.vector_store %arg13[%c0_17, %c0_18, %c0_19], %19 {strides = array<i32>} : memref<1x8x32xf32, #tpu.memory_space<vmem>>, vector<1x8x32xf32>,
    %c0_20 = arith.constant 0 : index
    %c0_21 = arith.constant 0 : index
    %c0_22 = arith.constant 0 : index
    %20 = vector.load %arg5[%c0_20, %c0_21, %c0_22] : memref<1x8x32xf32, #tpu.memory_space<vmem>>, vector<1x8x32xf32>
    %21 = vector.shape_cast %20 : vector<1x8x32xf32> to vector<8x32xf32>
    %c0_23 = arith.constant 0 : index
    %c0_24 = arith.constant 0 : index
    %22 = vector.load %arg8[%c0_23, %c0_24] : memref<32x32xf32, #tpu.memory_space<vmem>>, vector<32x32xf32>
    %cst_25 = arith.constant dense<0.000000e+00> : vector<8x32xf32>
    %23 = tpu.matmul %21, %22, %cst_25 {dimension_numbers = #tpu.dot_dimension_numbers<[1], [0], [0], [1], [0, 0, 1, 1], [], []>} : vector<8x32xf32>, vector<32x32xf32>, vector<8x32xf32> -> vector<8x32xf32>
    %c0_26 = arith.constant 0 : index
    %c0_27 = arith.constant 0 : index
    %24 = vector.load %arg11[%c0_26, %c0_27] : memref<1x32xf32, #tpu.memory_space<vmem>>, vector<1x32xf32>
    %25 = vector.broadcast %24 : vector<1x32xf32> to vector<8x32xf32>
    %26 = arith.addf %23, %25 : vector<8x32xf32>
    %c0_28 = arith.constant 0 : index
    %c0_29 = arith.constant 0 : index
    %c0_30 = arith.constant 0 : index
    %27 = vector.load %arg14[%c0_28, %c0_29, %c0_30] : memref<1x8x32xf32, #tpu.memory_space<vmem>>, vector<1x8x32xf32>
    %28 = vector.shape_cast %27 : vector<1x8x32xf32> to vector<8x32xf32>
    %29 = vector.shape_cast %26 : vector<8x32xf32> to vector<1x8x32xf32>
    tpu.vector_store %arg14[%c0_28, %c0_29, %c0_30], %29 {strides = array<i32>} : memref<1x8x32xf32, #tpu.memory_space<vmem>>, vector<1x8x32xf32>,
    return
  }
  func.func @transform_0(%arg0: i32, %arg1: i32, %arg2: i32) -> (i32, i32, i32) {
    %c0_i32 = arith.constant 0 : i32
    %c0_i32_0 = arith.constant 0 : i32
    return %arg0, %arg1, %c0_i32 : i32, i32, i32
  }
  func.func @transform_1(%arg0: i32, %arg1: i32, %arg2: i32) -> (i32, i32, i32) {
    %c0_i32 = arith.constant 0 : i32
    %c0_i32_0 = arith.constant 0 : i32
    return %arg0, %arg1, %c0_i32 : i32, i32, i32
  }
  func.func @transform_2(%arg0: i32, %arg1: i32, %arg2: i32) -> (i32, i32, i32) {
    %c0_i32 = arith.constant 0 : i32
    %c0_i32_0 = arith.constant 0 : i32
    return %arg0, %arg1, %c0_i32 : i32, i32, i32
  }
  func.func @transform_3(%arg0: i32, %arg1: i32, %arg2: i32) -> (i32, i32) {
    %c0_i32 = arith.constant 0 : i32
    %c0_i32_0 = arith.constant 0 : i32
    return %c0_i32, %arg2 : i32, i32
  }
  func.func @transform_4(%arg0: i32, %arg1: i32, %arg2: i32) -> (i32, i32) {
    %c0_i32 = arith.constant 0 : i32
    %c0_i32_0 = arith.constant 0 : i32
    return %c0_i32, %arg2 : i32, i32
  }
  func.func @transform_5(%arg0: i32, %arg1: i32, %arg2: i32) -> (i32, i32) {
    %c0_i32 = arith.constant 0 : i32
    %c0_i32_0 = arith.constant 0 : i32
    return %c0_i32, %arg2 : i32, i32
  }
  func.func @transform_6(%arg0: i32, %arg1: i32, %arg2: i32) -> (i32, i32) {
    %c0_i32 = arith.constant 0 : i32
    %c0_i32_0 = arith.constant 0 : i32
    return %c0_i32, %arg2 : i32, i32
  }
  func.func @transform_7(%arg0: i32, %arg1: i32, %arg2: i32) -> (i32, i32) {
    %c0_i32 = arith.constant 0 : i32
    %c0_i32_0 = arith.constant 0 : i32
    return %c0_i32, %arg2 : i32, i32
  }
  func.func @transform_8(%arg0: i32, %arg1: i32, %arg2: i32) -> (i32, i32) {
    %c0_i32 = arith.constant 0 : i32
    %c0_i32_0 = arith.constant 0 : i32
    return %c0_i32, %arg2 : i32, i32
  }
  func.func @transform_9(%arg0: i32, %arg1: i32, %arg2: i32) -> (i32, i32, i32) {
    %c0_i32 = arith.constant 0 : i32
    return %arg0, %arg1, %arg2 : i32, i32, i32
  }
  func.func @transform_10(%arg0: i32, %arg1: i32, %arg2: i32) -> (i32, i32, i32) {
    %c0_i32 = arith.constant 0 : i32
    return %arg0, %arg1, %arg2 : i32, i32, i32
  }
  func.func @transform_11(%arg0: i32, %arg1: i32, %arg2: i32) -> (i32, i32, i32) {
    %c0_i32 = arith.constant 0 : i32
    return %arg0, %arg1, %arg2 : i32, i32, i32
  }
}

</mosaic_0001>

<llo_original>
// kernel: tpu_custom_call.1
$region0: #{tpu_custom_call.1}
  #allocation0 [shape = 'u32[]', space=smem, size = 0x4, offset = 0x4, fixed_abs, tag = 'smem constant byte address 0x4 - core index']
  #allocation1 [shape = 'u32[72,128]{1,0:T(1,128)}', space=vmem, size = 0x9000, scoped, tag = 'internal scratch']
  %s0 = inlined_call_operand.hbm [shape: f32[2,8,32], index: 0, kind: input, shape index: {}]
  %s1 = inlined_call_operand.hbm [shape: f32[2,8,32], index: 1, kind: input, shape index: {}]
  %s2 = inlined_call_operand.hbm [shape: f32[2,8,32], index: 2, kind: input, shape index: {}]
  %s3 = inlined_call_operand.hbm [shape: f32[32,32], index: 3, kind: input, shape index: {}]
  %s4 = inlined_call_operand.hbm [shape: f32[32,32], index: 4, kind: input, shape index: {}]
  %s5 = inlined_call_operand.hbm [shape: f32[32,32], index: 5, kind: input, shape index: {}]
  %s6 = inlined_call_operand.vmem [shape: f32[1,32], index: 6, kind: input, shape index: {}]
  %s7 = inlined_call_operand.vmem [shape: f32[1,32], index: 7, kind: input, shape index: {}]
  %s8 = inlined_call_operand.vmem [shape: f32[1,32], index: 8, kind: input, shape index: {}]
  %s9 = inlined_call_operand.hbm [shape: f32[2,8,32], index: 9, kind: output, shape index: {0}]
  %s10 = inlined_call_operand.hbm [shape: f32[2,8,32], index: 10, kind: output, shape index: {1}]
  %s11 = inlined_call_operand.hbm [shape: f32[2,8,32], index: 11, kind: output, shape index: {2}]
  %12 = xla_tuple %s9, %s10, %s11
  %s13 = sld [smem:[#allocation0]]
  $region109: #{tpu_custom_call.1} parent=0
    _
  %s15 = ssub.s32 1, %s13
  %s16 = scalar_select 0, %s15, %s13
  $region1: #{tpu_custom_call.1} parent=0
    #allocation2 [shape = 'u8[8192]{0}', space=vmem, size = 0x2000, scoped, tag = 'input window, operand 0']
    #allocation3 [shape = 's32[2]{0}', space=sflag, size = 0x8, scoped, tag = 'scoped memory for tpu_custom_call.1']
    #allocation4 [shape = 's32[2]{0}', space=sflag, size = 0x8, scoped, tag = 'scoped memory for tpu_custom_call.1']
    #allocation5 [shape = 'u8[8192]{0}', space=vmem, size = 0x2000, scoped, tag = 'input window, operand 1']
    #allocation6 [shape = 's32[2]{0}', space=sflag, size = 0x8, scoped, tag = 'scoped memory for tpu_custom_call.1']
    #allocation7 [shape = 'u8[8192]{0}', space=vmem, size = 0x2000, scoped, tag = 'input window, operand 2']
    #allocation8 [shape = 'u8[16384]{0}', space=vmem, size = 0x4000, scoped, tag = 'input window, operand 3, single buffered']
    #allocation9 [shape = 's32[1]{0}', space=sflag, size = 0x4, scoped, tag = 'scoped memory for tpu_custom_call.1']
    #allocation10 [shape = 'u8[16384]{0}', space=vmem, size = 0x4000, scoped, tag = 'input window, operand 4, single buffered']
    #allocation11 [shape = 'u8[16384]{0}', space=vmem, size = 0x4000, scoped, tag = 'input window, operand 5, single buffered']
    #allocation12 [shape = 's32[1]{0}', space=sflag, size = 0x4, scoped, tag = 'scoped memory for tpu_custom_call.1']
    #allocation13 [shape = 'u8[8192]{0}', space=vmem, size = 0x2000, scoped, tag = 'output window, operand 0']
    #allocation14 [shape = 'u8[8192]{0}', space=vmem, size = 0x2000, scoped, tag = 'output window, operand 1']
    #allocation15 [shape = 's32[2]{0}', space=sflag, size = 0x8, scoped, tag = 'scoped memory for tpu_custom_call.1']
    #allocation16 [shape = 'u8[8192]{0}', space=vmem, size = 0x2000, scoped, tag = 'output window, operand 2']
    %17 = vsyncpa [#allocation3], 0
    %s18 = scalar_lea.sflag [#allocation3], 1
    %19 = vsyncpa %s18, 0
    %20 = vsyncpa [#allocation6], 0
    %s21 = scalar_lea.sflag [#allocation6], 1
    %22 = vsyncpa %s21, 0
    %23 = vsyncpa [#allocation9], 0
    %24 = vsyncpa [#allocation12], 0
    %25 = vsyncpa [#allocation4], 0
    %s26 = scalar_lea.sflag [#allocation4], 1
    %27 = vsyncpa %s26, 0
    %28 = vsyncpa [#allocation15], 0
    %s29 = scalar_lea.sflag [#allocation15], 1
    %30 = vsyncpa %s29, 0
    loop: start=0, step=1, limit=4
    $region2: #{tpu_custom_call.1} parent=1 // loop_pre_header
      _
    $region3: #{tpu_custom_call.1} parent=1 // loop_header
      %s32 = sphi 0, %s36
      %p33 = scmp.ge.s32.totalorder %s32, 4
      %s39 = sphi 0, %s58
      %s40 = sphi 0, %s54
      %s41 = sphi 0, %s50
      %s42 = sphi 0, %s39
      %s43 = sphi 0, %s40
      %s44 = sphi 0, %s41
      %s45 = sphi 0, %s42
      %s46 = sphi 0, %s43
      %s47 = sphi 0, %s44
      %s63 = sphi 0, %s65
      %s66 = sphi 0, %s63
      %s67 = sphi 0, %s66
      %s83 = sphi 0, %s67
      %s91 = sphi 0, %s93
      %s94 = sphi 0, %s91
      %s95 = sphi 0, %s94
      %s111 = sphi 0, %s95
      %s119 = sphi 0, %s121
      %s122 = sphi 0, %s119
      %s123 = sphi 0, %s122
      %s139 = sphi 0, %s123
      %s145 = sphi 0, %s147
      %s148 = sphi 0, %s145
      %s149 = sphi 0, %s148
      %s165 = sphi 0, %s149
      %s171 = sphi 0, %s173
      %s174 = sphi 0, %s171
      %s175 = sphi 0, %s174
      %s191 = sphi 0, %s175
      %s197 = sphi 0, %s199
      %s200 = sphi 0, %s197
      %s201 = sphi 0, %s200
      %s217 = sphi 0, %s201
      %s223 = sphi 0, %s225
      %s226 = sphi 0, %s223
      %s227 = sphi 0, %s226
      %s243 = sphi 0, %s227
      %s249 = sphi 0, %s251
      %s252 = sphi 0, %s249
      %s253 = sphi 0, %s252
      %s269 = sphi 0, %s253
      %s275 = sphi 0, %s277
      %s278 = sphi 0, %s275
      %s279 = sphi 0, %s278
      %s295 = sphi 0, %s279
      %s305 = sphi 0, %s307
      %s308 = sphi 0, %s305
      %s309 = sphi 0, %s308
      %s325 = sphi 0, %s309
      %s335 = sphi 0, %s337
      %s338 = sphi 0, %s335
      %s339 = sphi 0, %s338
      %s355 = sphi 0, %s339
      %s365 = sphi 0, %s367
      %s368 = sphi 0, %s365
      %s369 = sphi 0, %s368
      %s385 = sphi 0, %s369
    $region4: #{tpu_custom_call.1} parent=1 // loop_header_branch
      %35 = sbr.rel (%p33) target = $region8
    $region5: #{tpu_custom_call.1} parent=1 // loop_body
      %s37 = ssub.s32 %s32, 1
      %s38 = ssub.s32 %s32, 2
      %s48 = sadd.s32 1, %s41
      %p49 = scmp.ge.s32.totalorder %s48, 1
      %s50 = scalar_select %p49, 0, %s48
      %s51 = sadd.s32 1, %s40
      %s52 = scalar_select %p49, %s51, %s40
      %p53 = scmp.ge.s32.totalorder %s52, 1
      %s54 = scalar_select %p53, 0, %s52
      %s55 = sadd.s32 1, %s39
      %s56 = scalar_select %p53, %s55, %s39
      %p57 = scmp.ge.s32.totalorder %s56, 2
      %s58 = scalar_select %p57, 0, %s56
      %s59 = ssub.s32 %s39, %s58
      %s60 = ssub.s32 %s40, %s54
      %s61 = sor.u32 %s59, %s60
      %p62 = scmp.eq.s32.totalorder %s61, 0
      %s64 = sadd.s32 %s63, 1
      %s65 = scalar_select %p62, %s63, %s64
      %p68 = pneg %p62
      %p69 = scmp.eq.s32.totalorder %s32, 1
      %p70 = por %p68, %p69
      %p71 = scmp.ne.s32.totalorder %s63, %s66
      %p72 = scmp.eq.s32.totalorder %s32, 0
      %p73 = por %p71, %p72
      %p74 = scmp.ne.s32.totalorder %s63, %s66
      %p75 = scmp.eq.s32.totalorder %s37, 1
      %p76 = por %p74, %p75
      %p77 = scmp.ne.s32.totalorder %s66, %s67
      %p78 = scmp.eq.s32.totalorder %s37, 0
      %p79 = por %p77, %p78
      %p80 = scmp.ne.s32.totalorder %s66, %s67
      %p81 = scmp.eq.s32.totalorder %s38, 1
      %p82 = por %p80, %p81
      %p84 = scmp.ne.s32.totalorder %s67, %s83
      %p85 = scmp.eq.s32.totalorder %s38, 0
      %p86 = por %p84, %p85
      %s87 = ssub.s32 %s39, %s58
      %s88 = ssub.s32 %s40, %s54
      %s89 = sor.u32 %s87, %s88
      %p90 = scmp.eq.s32.totalorder %s89, 0
      %s92 = sadd.s32 %s91, 1
      %s93 = scalar_select %p90, %s91, %s92
      %p96 = pneg %p90
      %p97 = scmp.eq.s32.totalorder %s32, 1
      %p98 = por %p96, %p97
      %p99 = scmp.ne.s32.totalorder %s91, %s94
      %p100 = scmp.eq.s32.totalorder %s32, 0
      %p101 = por %p99, %p100
      %p102 = scmp.ne.s32.totalorder %s91, %s94
      %p103 = scmp.eq.s32.totalorder %s37, 1
      %p104 = por %p102, %p103
      %p105 = scmp.ne.s32.totalorder %s94, %s95
      %p106 = scmp.eq.s32.totalorder %s37, 0
      %p107 = por %p105, %p106
      %p108 = scmp.ne.s32.totalorder %s94, %s95
      %p109 = scmp.eq.s32.totalorder %s38, 1
      %p110 = por %p108, %p109
      %p112 = scmp.ne.s32.totalorder %s95, %s111
      %p113 = scmp.eq.s32.totalorder %s38, 0
      %p114 = por %p112, %p113
      %s115 = ssub.s32 %s39, %s58
      %s116 = ssub.s32 %s40, %s54
      %s117 = sor.u32 %s115, %s116
      %p118 = scmp.eq.s32.totalorder %s117, 0
      %s120 = sadd.s32 %s119, 1
      %s121 = scalar_select %p118, %s119, %s120
      %p124 = pneg %p118
      %p125 = scmp.eq.s32.totalorder %s32, 1
      %p126 = por %p124, %p125
      %p127 = scmp.ne.s32.totalorder %s119, %s122
      %p128 = scmp.eq.s32.totalorder %s32, 0
      %p129 = por %p127, %p128
      %p130 = scmp.ne.s32.totalorder %s119, %s122
      %p131 = scmp.eq.s32.totalorder %s37, 1
      %p132 = por %p130, %p131
      %p133 = scmp.ne.s32.totalorder %s122, %s123
      %p134 = scmp.eq.s32.totalorder %s37, 0
      %p135 = por %p133, %p134
      %p136 = scmp.ne.s32.totalorder %s122, %s123
      %p137 = scmp.eq.s32.totalorder %s38, 1
      %p138 = por %p136, %p137
      %p140 = scmp.ne.s32.totalorder %s123, %s139
      %p141 = scmp.eq.s32.totalorder %s38, 0
      %p142 = por %p140, %p141
      %s143 = ssub.s32 %s41, %s50
      %p144 = scmp.eq.s32.totalorder %s143, 0
      %s146 = sadd.s32 %s145, 1
      %s147 = scalar_select %p144, %s145, %s146
      %p150 = pneg %p144
      %p151 = scmp.eq.s32.totalorder %s32, 1
      %p152 = por %p150, %p151
      %p153 = scmp.ne.s32.totalorder %s145, %s148
      %p154 = scmp.eq.s32.totalorder %s32, 0
      %p155 = por %p153, %p154
      %p156 = scmp.ne.s32.totalorder %s145, %s148
      %p157 = scmp.eq.s32.totalorder %s37, 1
      %p158 = por %p156, %p157
      %p159 = scmp.ne.s32.totalorder %s148, %s149
      %p160 = scmp.eq.s32.totalorder %s37, 0
      %p161 = por %p159, %p160
      %p162 = scmp.ne.s32.totalorder %s148, %s149
      %p163 = scmp.eq.s32.totalorder %s38, 1
      %p164 = por %p162, %p163
      %p166 = scmp.ne.s32.totalorder %s149, %s165
      %p167 = scmp.eq.s32.totalorder %s38, 0
      %p168 = por %p166, %p167
      %s169 = ssub.s32 %s41, %s50
      %p170 = scmp.eq.s32.totalorder %s169, 0
      %s172 = sadd.s32 %s171, 1
      %s173 = scalar_select %p170, %s171, %s172
      %p176 = pneg %p170
      %p177 = scmp.eq.s32.totalorder %s32, 1
      %p178 = por %p176, %p177
      %p179 = scmp.ne.s32.totalorder %s171, %s174
      %p180 = scmp.eq.s32.totalorder %s32, 0
      %p181 = por %p179, %p180
      %p182 = scmp.ne.s32.totalorder %s171, %s174
      %p183 = scmp.eq.s32.totalorder %s37, 1
      %p184 = por %p182, %p183
      %p185 = scmp.ne.s32.totalorder %s174, %s175
      %p186 = scmp.eq.s32.totalorder %s37, 0
      %p187 = por %p185, %p186
      %p188 = scmp.ne.s32.totalorder %s174, %s175
      %p189 = scmp.eq.s32.totalorder %s38, 1
      %p190 = por %p188, %p189
      %p192 = scmp.ne.s32.totalorder %s175, %s191
      %p193 = scmp.eq.s32.totalorder %s38, 0
      %p194 = por %p192, %p193
      %s195 = ssub.s32 %s41, %s50
      %p196 = scmp.eq.s32.totalorder %s195, 0
      %s198 = sadd.s32 %s197, 1
      %s199 = scalar_select %p196, %s197, %s198
      %p202 = pneg %p196
      %p203 = scmp.eq.s32.totalorder %s32, 1
      %p204 = por %p202, %p203
      %p205 = scmp.ne.s32.totalorder %s197, %s200
      %p206 = scmp.eq.s32.totalorder %s32, 0
      %p207 = por %p205, %p206
      %p208 = scmp.ne.s32.totalorder %s197, %s200
      %p209 = scmp.eq.s32.totalorder %s37, 1
      %p210 = por %p208, %p209
      %p211 = scmp.ne.s32.totalorder %s200, %s201
      %p212 = scmp.eq.s32.totalorder %s37, 0
      %p213 = por %p211, %p212
      %p214 = scmp.ne.s32.totalorder %s200, %s201
      %p215 = scmp.eq.s32.totalorder %s38, 1
      %p216 = por %p214, %p215
      %p218 = scmp.ne.s32.totalorder %s201, %s217
      %p219 = scmp.eq.s32.totalorder %s38, 0
      %p220 = por %p218, %p219
      %s221 = ssub.s32 %s41, %s50
      %p222 = scmp.eq.s32.totalorder %s221, 0
      %s224 = sadd.s32 %s223, 1
      %s225 = scalar_select %p222, %s223, %s224
      %p228 = pneg %p222
      %p229 = scmp.eq.s32.totalorder %s32, 1
      %p230 = por %p228, %p229
      %p231 = scmp.ne.s32.totalorder %s223, %s226
      %p232 = scmp.eq.s32.totalorder %s32, 0
      %p233 = por %p231, %p232
      %p234 = scmp.ne.s32.totalorder %s223, %s226
      %p235 = scmp.eq.s32.totalorder %s37, 1
      %p236 = por %p234, %p235
      %p237 = scmp.ne.s32.totalorder %s226, %s227
      %p238 = scmp.eq.s32.totalorder %s37, 0
      %p239 = por %p237, %p238
      %p240 = scmp.ne.s32.totalorder %s226, %s227
      %p241 = scmp.eq.s32.totalorder %s38, 1
      %p242 = por %p240, %p241
      %p244 = scmp.ne.s32.totalorder %s227, %s243
      %p245 = scmp.eq.s32.totalorder %s38, 0
      %p246 = por %p244, %p245
      %s247 = ssub.s32 %s41, %s50
      %p248 = scmp.eq.s32.totalorder %s247, 0
      %s250 = sadd.s32 %s249, 1
      %s251 = scalar_select %p248, %s249, %s250
      %p254 = pneg %p248
      %p255 = scmp.eq.s32.totalorder %s32, 1
      %p256 = por %p254, %p255
      %p257 = scmp.ne.s32.totalorder %s249, %s252
      %p258 = scmp.eq.s32.totalorder %s32, 0
      %p259 = por %p257, %p258
      %p260 = scmp.ne.s32.totalorder %s249, %s252
      %p261 = scmp.eq.s32.totalorder %s37, 1
      %p262 = por %p260, %p261
      %p263 = scmp.ne.s32.totalorder %s252, %s253
      %p264 = scmp.eq.s32.totalorder %s37, 0
      %p265 = por %p263, %p264
      %p266 = scmp.ne.s32.totalorder %s252, %s253
      %p267 = scmp.eq.s32.totalorder %s38, 1
      %p268 = por %p266, %p267
      %p270 = scmp.ne.s32.totalorder %s253, %s269
      %p271 = scmp.eq.s32.totalorder %s38, 0
      %p272 = por %p270, %p271
      %s273 = ssub.s32 %s41, %s50
      %p274 = scmp.eq.s32.totalorder %s273, 0
      %s276 = sadd.s32 %s275, 1
      %s277 = scalar_select %p274, %s275, %s276
      %p280 = pneg %p274
      %p281 = scmp.eq.s32.totalorder %s32, 1
      %p282 = por %p280, %p281
      %p283 = scmp.ne.s32.totalorder %s275, %s278
      %p284 = scmp.eq.s32.totalorder %s32, 0
      %p285 = por %p283, %p284
      %p286 = scmp.ne.s32.totalorder %s275, %s278
      %p287 = scmp.eq.s32.totalorder %s37, 1
      %p288 = por %p286, %p287
      %p289 = scmp.ne.s32.totalorder %s278, %s279
      %p290 = scmp.eq.s32.totalorder %s37, 0
      %p291 = por %p289, %p290
      %p292 = scmp.ne.s32.totalorder %s278, %s279
      %p293 = scmp.eq.s32.totalorder %s38, 1
      %p294 = por %p292, %p293
      %p296 = scmp.ne.s32.totalorder %s279, %s295
      %p297 = scmp.eq.s32.totalorder %s38, 0
      %p298 = por %p296, %p297
      %s299 = ssub.s32 %s39, %s58
      %s300 = ssub.s32 %s40, %s54
      %s301 = sor.u32 %s299, %s300
      %s302 = ssub.s32 %s41, %s50
      %s303 = sor.u32 %s301, %s302
      %p304 = scmp.eq.s32.totalorder %s303, 0
      %s306 = sadd.s32 %s305, 1
      %s307 = scalar_select %p304, %s305, %s306
      %p310 = pneg %p304
      %p311 = scmp.eq.s32.totalorder %s32, 1
      %p312 = por %p310, %p311
      %p313 = scmp.ne.s32.totalorder %s305, %s308
      %p314 = scmp.eq.s32.totalorder %s32, 0
      %p315 = por %p313, %p314
      %p316 = scmp.ne.s32.totalorder %s305, %s308
      %p317 = scmp.eq.s32.totalorder %s37, 1
      %p318 = por %p316, %p317
      %p319 = scmp.ne.s32.totalorder %s308, %s309
      %p320 = scmp.eq.s32.totalorder %s37, 0
      %p321 = por %p319, %p320
      %p322 = scmp.ne.s32.totalorder %s308, %s309
      %p323 = scmp.eq.s32.totalorder %s38, 1
      %p324 = por %p322, %p323
      %p326 = scmp.ne.s32.totalorder %s309, %s325
      %p327 = scmp.eq.s32.totalorder %s38, 0
      %p328 = por %p326, %p327
      %s329 = ssub.s32 %s39, %s58
      %s330 = ssub.s32 %s40, %s54
      %s331 = sor.u32 %s329, %s330
      %s332 = ssub.s32 %s41, %s50
      %s333 = sor.u32 %s331, %s332
      %p334 = scmp.eq.s32.totalorder %s333, 0
      %s336 = sadd.s32 %s335, 1
      %s337 = scalar_select %p334, %s335, %s336
      %p340 = pneg %p334
      %p341 = scmp.eq.s32.totalorder %s32, 1
      %p342 = por %p340, %p341
      %p343 = scmp.ne.s32.totalorder %s335, %s338
      %p344 = scmp.eq.s32.totalorder %s32, 0
      %p345 = por %p343, %p344
      %p346 = scmp.ne.s32.totalorder %s335, %s338
      %p347 = scmp.eq.s32.totalorder %s37, 1
      %p348 = por %p346, %p347
      %p349 = scmp.ne.s32.totalorder %s338, %s339
      %p350 = scmp.eq.s32.totalorder %s37, 0
      %p351 = por %p349, %p350
      %p352 = scmp.ne.s32.totalorder %s338, %s339
      %p353 = scmp.eq.s32.totalorder %s38, 1
      %p354 = por %p352, %p353
      %p356 = scmp.ne.s32.totalorder %s339, %s355
      %p357 = scmp.eq.s32.totalorder %s38, 0
      %p358 = por %p356, %p357
      %s359 = ssub.s32 %s39, %s58
      %s360 = ssub.s32 %s40, %s54
      %s361 = sor.u32 %s359, %s360
      %s362 = ssub.s32 %s41, %s50
      %s363 = sor.u32 %s361, %s362
      %p364 = scmp.eq.s32.totalorder %s363, 0
      %s366 = sadd.s32 %s365, 1
      %s367 = scalar_select %p364, %s365, %s366
      %p370 = pneg %p364
      %p371 = scmp.eq.s32.totalorder %s32, 1
      %p372 = por %p370, %p371
      %p373 = scmp.ne.s32.totalorder %s365, %s368
      %p374 = scmp.eq.s32.totalorder %s32, 0
      %p375 = por %p373, %p374
      %p376 = scmp.ne.s32.totalorder %s365, %s368
      %p377 = scmp.eq.s32.totalorder %s37, 1
      %p378 = por %p376, %p377
      %p379 = scmp.ne.s32.totalorder %s368, %s369
      %p380 = scmp.eq.s32.totalorder %s37, 0
      %p381 = por %p379, %p380
      %p382 = scmp.ne.s32.totalorder %s368, %s369
      %p383 = scmp.eq.s32.totalorder %s38, 1
      %p384 = por %p382, %p383
      %p386 = scmp.ne.s32.totalorder %s369, %s385
      %p387 = scmp.eq.s32.totalorder %s38, 0
      %p388 = por %p386, %p387
      %p389 = scmp.le.s32.totalorder 1, %s32
      %p390 = scmp.lt.s32.totalorder %s32, 3
      %p391 = pnand %p389, %p390
      %p392 = pneg %p391
      // Predicated region
      $region9: #{tpu_custom_call.1} parent=5 // pred_check
        _
      $region10: #{tpu_custom_call.1} parent=5 // pred_check_branch
        %394 = sbr.rel (%p391) target = $region12
      $region11: #{tpu_custom_call.1} parent=5 // pred_region
        %s395 = ssub.s32 %s32, 1
        // Predicated region
        $region13: #{tpu_custom_call.1} parent=11 // pred_check
          %p396 = pneg %p161
        $region14: #{tpu_custom_call.1} parent=11 // pred_check_branch
          %398 = sbr.rel (%p396) target = $region16
        $region15: #{tpu_custom_call.1} parent=11 // pred_region
          %400 = vsyncadd [#allocation9], 0
          %s401 = smul.addr %s44, 8
          %s402 = scalar_lea.hbm %s3, %s401
          %s403 = sshll.u32 %s402, 4
          %s404 = int_to_ptr.hbm [resolvable:$true] %s403
          %s405 = sshll.u32 [#allocation8], 4
          %s406 = int_to_ptr.vmem [resolvable:$true] %s405
          %411 = dma.hbm_to_vmem [thread:$0]  %s404, 512, %s406, [#allocation9], 128, 128, 8
        $region16: #{tpu_custom_call.1} parent=11 // pred_fallthru
          _
        // Predicated region
        $region17: #{tpu_custom_call.1} parent=11 // pred_check
          %p412 = pneg %p187
        $region18: #{tpu_custom_call.1} parent=11 // pred_check_branch
          %414 = sbr.rel (%p412) target = $region20
        $region19: #{tpu_custom_call.1} parent=11 // pred_region
          %416 = vsyncadd [#allocation9], 0
          %s417 = smul.addr %s44, 8
          %s418 = scalar_lea.hbm %s4, %s417
          %s419 = sshll.u32 %s418, 4
          %s420 = int_to_ptr.hbm [resolvable:$true] %s419
          %s421 = sshll.u32 [#allocation10], 4
          %s422 = int_to_ptr.vmem [resolvable:$true] %s421
          %427 = dma.hbm_to_vmem [thread:$0]  %s420, 512, %s422, [#allocation9], 128, 128, 8
        $region20: #{tpu_custom_call.1} parent=11 // pred_fallthru
          _
        // Predicated region
        $region21: #{tpu_custom_call.1} parent=11 // pred_check
          %p428 = pneg %p213
        $region22: #{tpu_custom_call.1} parent=11 // pred_check_branch
          %430 = sbr.rel (%p428) target = $region24
        $region23: #{tpu_custom_call.1} parent=11 // pred_region
          %432 = vsyncadd [#allocation12], 0
          %s433 = smul.addr %s44, 8
          %s434 = scalar_lea.hbm %s5, %s433
          %s435 = sshll.u32 %s434, 4
          %s436 = int_to_ptr.hbm [resolvable:$true] %s435
          %s437 = sshll.u32 [#allocation11], 4
          %s438 = int_to_ptr.vmem [resolvable:$true] %s437
          %443 = dma.hbm_to_vmem [thread:$0]  %s436, 512, %s438, [#allocation12], 128, 128, 8
        $region24: #{tpu_custom_call.1} parent=11 // pred_fallthru
          _
        // Predicated region
        $region25: #{tpu_custom_call.1} parent=11 // pred_check
          %p444 = pneg %p239
        $region26: #{tpu_custom_call.1} parent=11 // pred_check_branch
          %446 = sbr.rel (%p444) target = $region28
        $region27: #{tpu_custom_call.1} parent=11 // pred_region
          %p447 = scmp.lt.s32.totalorder %s44, 0
          %s448 = scalar_select %p447, %s44, 0
          %s449 = scalar_lea.vmem %s6, %s448
        $region28: #{tpu_custom_call.1} parent=11 // pred_fallthru
          _
        // Predicated region
        $region29: #{tpu_custom_call.1} parent=11 // pred_check
          %p450 = pneg %p265
        $region30: #{tpu_custom_call.1} parent=11 // pred_check_branch
          %452 = sbr.rel (%p450) target = $region32
        $region31: #{tpu_custom_call.1} parent=11 // pred_region
          %p453 = scmp.lt.s32.totalorder %s44, 0
          %s454 = scalar_select %p453, %s44, 0
          %s455 = scalar_lea.vmem %s7, %s454
        $region32: #{tpu_custom_call.1} parent=11 // pred_fallthru
          _
        // Predicated region
        $region33: #{tpu_custom_call.1} parent=11 // pred_check
          %p456 = pneg %p291
        $region34: #{tpu_custom_call.1} parent=11 // pred_check_branch
          %458 = sbr.rel (%p456) target = $region36
        $region35: #{tpu_custom_call.1} parent=11 // pred_region
          %p459 = scmp.lt.s32.totalorder %s44, 0
          %s460 = scalar_select %p459, %s44, 0
          %s461 = scalar_lea.vmem %s8, %s460
        $region36: #{tpu_custom_call.1} parent=11 // pred_fallthru
          _
      $region12: #{tpu_custom_call.1} parent=5 // pred_fallthru
        _
      %p462 = scmp.lt.s32.totalorder %s32, 2
      // Predicated region
      $region37: #{tpu_custom_call.1} parent=5 // pred_check
        %p463 = pneg %p462
      $region38: #{tpu_custom_call.1} parent=5 // pred_check_branch
        %465 = sbr.rel (%p463) target = $region40
      $region39: #{tpu_custom_call.1} parent=5 // pred_region
        // Predicated region
        $region41: #{tpu_custom_call.1} parent=39 // pred_check
          %p466 = pneg %p73
        $region42: #{tpu_custom_call.1} parent=39 // pred_check_branch
          %468 = sbr.rel (%p466) target = $region44
        $region43: #{tpu_custom_call.1} parent=39 // pred_region
          %s469 = sand.u32 %s63, 1
          %s470 = scalar_lea.sflag [#allocation3], %s469
          %s471 = sand.u32 %s63, 1
          %s472 = smul.addr %s471, 8
          %s473 = scalar_lea.vmem [#allocation2], %s472
          %475 = vsyncadd %s470, 0
          %s476 = sadd.s32 %s40, %s39
          %s477 = smul.addr %s476, 8
          %s478 = scalar_lea.hbm %s0, %s477
          %s480 = sshll.u32 %s478, 4
          %s481 = int_to_ptr.hbm [resolvable:$true] %s480
          %s482 = sshll.u32 %s473, 4
          %s483 = int_to_ptr.vmem [resolvable:$true] %s482
          %485 = dma.hbm_to_vmem [thread:$0]  %s481, 128, %s483, %s470
        $region44: #{tpu_custom_call.1} parent=39 // pred_fallthru
          _
        // Predicated region
        $region45: #{tpu_custom_call.1} parent=39 // pred_check
          %p486 = pneg %p101
        $region46: #{tpu_custom_call.1} parent=39 // pred_check_branch
          %488 = sbr.rel (%p486) target = $region48
        $region47: #{tpu_custom_call.1} parent=39 // pred_region
          %s489 = sand.u32 %s32, 1
          %s490 = scalar_lea.sflag [#allocation6], %s489
          %s491 = sand.u32 %s91, 1
          %s492 = smul.addr %s491, 8
          %s493 = scalar_lea.vmem [#allocation5], %s492
          %495 = vsyncadd %s490, 0
          %s496 = sadd.s32 %s40, %s39
          %s497 = smul.addr %s496, 8
          %s498 = scalar_lea.hbm %s1, %s497
          %s500 = sshll.u32 %s498, 4
          %s501 = int_to_ptr.hbm [resolvable:$true] %s500
          %s502 = sshll.u32 %s493, 4
          %s503 = int_to_ptr.vmem [resolvable:$true] %s502
          %505 = dma.hbm_to_vmem [thread:$0]  %s501, 128, %s503, %s490
        $region48: #{tpu_custom_call.1} parent=39 // pred_fallthru
          _
        // Predicated region
        $region49: #{tpu_custom_call.1} parent=39 // pred_check
          %p506 = pneg %p129
        $region50: #{tpu_custom_call.1} parent=39 // pred_check_branch
          %508 = sbr.rel (%p506) target = $region52
        $region51: #{tpu_custom_call.1} parent=39 // pred_region
          %s509 = sand.u32 %s32, 1
          %s510 = scalar_lea.sflag [#allocation6], %s509
          %s511 = sand.u32 %s119, 1
          %s512 = smul.addr %s511, 8
          %s513 = scalar_lea.vmem [#allocation7], %s512
          %515 = vsyncadd %s510, 0
          %s516 = sadd.s32 %s40, %s39
          %s517 = smul.addr %s516, 8
          %s518 = scalar_lea.hbm %s2, %s517
          %s520 = sshll.u32 %s518, 4
          %s521 = int_to_ptr.hbm [resolvable:$true] %s520
          %s522 = sshll.u32 %s513, 4
          %s523 = int_to_ptr.vmem [resolvable:$true] %s522
          %525 = dma.hbm_to_vmem [thread:$0]  %s521, 128, %s523, %s510
        $region52: #{tpu_custom_call.1} parent=39 // pred_fallthru
          _
      $region40: #{tpu_custom_call.1} parent=5 // pred_fallthru
        _
      %p526 = scmp.le.s32.totalorder 1, %s32
      %p527 = scmp.lt.s32.totalorder %s32, 3
      %p528 = pnand %p526, %p527
      %p529 = pneg %p528
      // Predicated region
      $region53: #{tpu_custom_call.1} parent=5 // pred_check
        _
      $region54: #{tpu_custom_call.1} parent=5 // pred_check_branch
        %531 = sbr.rel (%p528) target = $region56
      $region55: #{tpu_custom_call.1} parent=5 // pred_region
        %s532 = ssub.s32 %s32, 1
        %s533 = sand.u32 %s66, 1
        %s534 = scalar_lea.sflag [#allocation3], %s533
        %s535 = sand.u32 %s66, 1
        %s536 = smul.addr %s535, 8
        %s537 = scalar_lea.vmem [#allocation2], %s536
        // Predicated region
        $region57: #{tpu_custom_call.1} parent=55 // pred_check
          %p538 = pneg %p79
        $region58: #{tpu_custom_call.1} parent=55 // pred_check_branch
          %540 = sbr.rel (%p538) target = $region60
        $region59: #{tpu_custom_call.1} parent=55 // pred_region
          %542 = dma.done %s534, 128
        $region60: #{tpu_custom_call.1} parent=55 // pred_fallthru
          _
        %s543 = sand.u32 %s37, 1
        %s544 = scalar_lea.sflag [#allocation6], %s543
        %s545 = sand.u32 %s94, 1
        %s546 = smul.addr %s545, 8
        %s547 = scalar_lea.vmem [#allocation5], %s546
        // Predicated region
        $region61: #{tpu_custom_call.1} parent=55 // pred_check
          %p548 = pneg %p107
        $region62: #{tpu_custom_call.1} parent=55 // pred_check_branch
          %550 = sbr.rel (%p548) target = $region64
        $region63: #{tpu_custom_call.1} parent=55 // pred_region
          %552 = dma.done %s544, 128
        $region64: #{tpu_custom_call.1} parent=55 // pred_fallthru
          _
        %s553 = sand.u32 %s37, 1
        %s554 = scalar_lea.sflag [#allocation6], %s553
        %s555 = sand.u32 %s122, 1
        %s556 = smul.addr %s555, 8
        %s557 = scalar_lea.vmem [#allocation7], %s556
        // Predicated region
        $region65: #{tpu_custom_call.1} parent=55 // pred_check
          %p558 = pneg %p135
        $region66: #{tpu_custom_call.1} parent=55 // pred_check_branch
          %560 = sbr.rel (%p558) target = $region68
        $region67: #{tpu_custom_call.1} parent=55 // pred_region
          %562 = dma.done %s554, 128
        $region68: #{tpu_custom_call.1} parent=55 // pred_fallthru
          _
        // Predicated region
        $region69: #{tpu_custom_call.1} parent=55 // pred_check
          %p563 = pneg %p161
        $region70: #{tpu_custom_call.1} parent=55 // pred_check_branch
          %565 = sbr.rel (%p563) target = $region72
        $region71: #{tpu_custom_call.1} parent=55 // pred_region
          %567 = dma.done [#allocation9], 512
        $region72: #{tpu_custom_call.1} parent=55 // pred_fallthru
          _
        // Predicated region
        $region73: #{tpu_custom_call.1} parent=55 // pred_check
          %p568 = pneg %p187
        $region74: #{tpu_custom_call.1} parent=55 // pred_check_branch
          %570 = sbr.rel (%p568) target = $region76
        $region75: #{tpu_custom_call.1} parent=55 // pred_region
          %572 = dma.done [#allocation9], 512
        $region76: #{tpu_custom_call.1} parent=55 // pred_fallthru
          _
        // Predicated region
        $region77: #{tpu_custom_call.1} parent=55 // pred_check
          %p573 = pneg %p213
        $region78: #{tpu_custom_call.1} parent=55 // pred_check_branch
          %575 = sbr.rel (%p573) target = $region80
        $region79: #{tpu_custom_call.1} parent=55 // pred_region
          %577 = dma.done [#allocation12], 512
        $region80: #{tpu_custom_call.1} parent=55 // pred_fallthru
          _
        %s578 = sand.u32 %s66, 1
        %s579 = scalar_lea.sflag [#allocation3], %s578
        %s580 = sand.u32 %s66, 1
        %s581 = smul.addr %s580, 8
        %s582 = scalar_lea.vmem [#allocation2], %s581
        %p583 = pneg %p79
        %p584 = pneg %p76
        %s585 = sand.u32 %s37, 1
        %s586 = scalar_lea.sflag [#allocation6], %s585
        %s587 = sand.u32 %s94, 1
        %s588 = smul.addr %s587, 8
        %s589 = scalar_lea.vmem [#allocation5], %s588
        %p590 = pneg %p107
        %p591 = pneg %p104
        %s592 = sand.u32 %s37, 1
        %s593 = scalar_lea.sflag [#allocation6], %s592
        %s594 = sand.u32 %s122, 1
        %s595 = smul.addr %s594, 8
        %s596 = scalar_lea.vmem [#allocation7], %s595
        %p597 = pneg %p135
        %p598 = pneg %p132
        %p599 = pneg %p161
        %p600 = pneg %p158
        %p601 = pneg %p187
        %p602 = pneg %p184
        %p603 = pneg %p213
        %p604 = pneg %p210
        %p605 = scmp.lt.s32.totalorder %s44, 0
        %s606 = scalar_select %p605, %s44, 0
        %s607 = scalar_lea.vmem %s6, %s606
        %p608 = pneg %p239
        %p609 = pneg %p236
        %p610 = scmp.lt.s32.totalorder %s44, 0
        %s611 = scalar_select %p610, %s44, 0
        %s612 = scalar_lea.vmem %s7, %s611
        %p613 = pneg %p265
        %p614 = pneg %p262
        %p615 = scmp.lt.s32.totalorder %s44, 0
        %s616 = scalar_select %p615, %s44, 0
        %s617 = scalar_lea.vmem %s8, %s616
        %p618 = pneg %p291
        %p619 = pneg %p288
        %p620 = pneg %p321
        %p621 = pneg %p318
        %s622 = sand.u32 %s308, 1
        %s623 = scalar_lea.sflag [#allocation4], %s622
        %s624 = sand.u32 %s308, 1
        %s625 = smul.addr %s624, 8
        %s626 = scalar_lea.vmem [#allocation13], %s625
        %p627 = pneg %p351
        %p628 = pneg %p348
        %s629 = sand.u32 %s37, 1
        %s630 = scalar_lea.sflag [#allocation15], %s629
        %s631 = sand.u32 %s338, 1
        %s632 = smul.addr %s631, 8
        %s633 = scalar_lea.vmem [#allocation14], %s632
        %p634 = pneg %p381
        %p635 = pneg %p378
        %s636 = sand.u32 %s37, 1
        %s637 = scalar_lea.sflag [#allocation15], %s636
        %s638 = sand.u32 %s368, 1
        %s639 = smul.addr %s638, 8
        %s640 = scalar_lea.vmem [#allocation16], %s639
        %p641 = scmp.lt.s32.totalorder %s44, 0
        %s642 = scalar_select %p641, %s44, 0
        %s643 = scalar_lea.vmem %s6, %s642
        %p644 = scmp.lt.s32.totalorder %s44, 0
        %s645 = scalar_select %p644, %s44, 0
        %s646 = scalar_lea.vmem %s7, %s645
        %p647 = scmp.lt.s32.totalorder %s44, 0
        %s648 = scalar_select %p647, %s44, 0
        %s649 = scalar_lea.vmem %s8, %s648
        %v650 = vld [vmem:[%s537] sm:$0xff]
        %v651 = vld [vmem:[#allocation8] sm:$0xff]
        %v652 = vld [vmem:[#allocation8 + $0x8] sm:$0xff]
        %v653 = vld [vmem:[#allocation8 + $0x10] sm:$0xff]
        %v654 = vld [vmem:[#allocation8 + $0x18] sm:$0xff]
        %v655 = vld [vmem:[%s643] sm:$0x1]
        %v657 = vperm.slane %v655, 0
        %vm659 = vcmask 261120
        %v661 = vsel %vm659, %v650, 0
        %663 = vmatpush.msra.mxu0 0.0
        %664 = vmatpush.msra.mxu0 0.0
        %665 = vmatpush.msra.mxu0 0.0
        %666 = vmatpush.msra.mxu0 0.0
        %667 = vmatpush.msra.mxu0 0.0
        %668 = vmatpush.msra.mxu0 0.0
        %669 = vmatpush.msra.mxu0 0.0
        %670 = vmatpush.msra.mxu0 0.0
        %671 = vmatpush.msra.mxu0 0.0
        %672 = vmatpush.msra.mxu0 0.0
        %673 = vmatpush.msra.mxu0 0.0
        %674 = vmatpush.msra.mxu0 0.0
        %675 = vmatpush.msra.mxu0 %v654
        %676 = vmatpush.msra.mxu0 %v653
        %677 = vmatpush.msra.mxu0 %v652
        %678 = vmatpush.msra.mxu0 %v651
        %679 = vmatmul.f32.gmra.mxu0 %v661
        %v680 = vpop.f32.mrf.mxu0
        %v681 = vadd.f32 %v657, %v680
        %682 = vdwg.mxu0
        %683 = vst.msk [vmem:[%s626] sm:$0xff] %vm659, %v681
        %v684 = vld [vmem:[%s547] sm:$0xff]
        %v685 = vld [vmem:[#allocation10] sm:$0xff]
        %v686 = vld [vmem:[#allocation10 + $0x8] sm:$0xff]
        %v687 = vld [vmem:[#allocation10 + $0x10] sm:$0xff]
        %v688 = vld [vmem:[#allocation10 + $0x18] sm:$0xff]
        %v689 = vld [vmem:[%s646] sm:$0x1]
        %v691 = vperm.slane %v689, 0
        %v694 = vsel %vm659, %v684, 0
        %696 = vmatpush.msra.mxu0 0.0
        %697 = vmatpush.msra.mxu0 0.0
        %698 = vmatpush.msra.mxu0 0.0
        %699 = vmatpush.msra.mxu0 0.0
        %700 = vmatpush.msra.mxu0 0.0
        %701 = vmatpush.msra.mxu0 0.0
        %702 = vmatpush.msra.mxu0 0.0
        %703 = vmatpush.msra.mxu0 0.0
        %704 = vmatpush.msra.mxu0 0.0
        %705 = vmatpush.msra.mxu0 0.0
        %706 = vmatpush.msra.mxu0 0.0
        %707 = vmatpush.msra.mxu0 0.0
        %708 = vmatpush.msra.mxu0 %v688
        %709 = vmatpush.msra.mxu0 %v687
        %710 = vmatpush.msra.mxu0 %v686
        %711 = vmatpush.msra.mxu0 %v685
        %712 = vmatmul.f32.gmra.mxu0 %v694
        %v713 = vpop.f32.mrf.mxu0
        %v714 = vadd.f32 %v691, %v713
        %715 = vdwg.mxu0
        %716 = vst.msk [vmem:[%s633] sm:$0xff] %vm659, %v714
        %v717 = vld [vmem:[%s557] sm:$0xff]
        %v718 = vld [vmem:[#allocation11] sm:$0xff]
        %v719 = vld [vmem:[#allocation11 + $0x8] sm:$0xff]
        %v720 = vld [vmem:[#allocation11 + $0x10] sm:$0xff]
        %v721 = vld [vmem:[#allocation11 + $0x18] sm:$0xff]
        %v722 = vld [vmem:[%s649] sm:$0x1]
        %v724 = vperm.slane %v722, 0
        %v727 = vsel %vm659, %v717, 0
        %729 = vmatpush.msra.mxu0 0.0
        %730 = vmatpush.msra.mxu0 0.0
        %731 = vmatpush.msra.mxu0 0.0
        %732 = vmatpush.msra.mxu0 0.0
        %733 = vmatpush.msra.mxu0 0.0
        %734 = vmatpush.msra.mxu0 0.0
        %735 = vmatpush.msra.mxu0 0.0
        %736 = vmatpush.msra.mxu0 0.0
        %737 = vmatpush.msra.mxu0 0.0
        %738 = vmatpush.msra.mxu0 0.0
        %739 = vmatpush.msra.mxu0 0.0
        %740 = vmatpush.msra.mxu0 0.0
        %741 = vmatpush.msra.mxu0 %v721
        %742 = vmatpush.msra.mxu0 %v720
        %743 = vmatpush.msra.mxu0 %v719
        %744 = vmatpush.msra.mxu0 %v718
        %745 = vmatmul.f32.gmra.mxu0 %v727
        %v746 = vpop.f32.mrf.mxu0
        %v747 = vadd.f32 %v724, %v746
        %748 = vdwg.mxu0
        %749 = vst.msk [vmem:[%s640] sm:$0xff] %vm659, %v747
        %s750 = sand.u32 %s308, 1
        %s751 = scalar_lea.sflag [#allocation4], %s750
        %s752 = sand.u32 %s308, 1
        %s753 = smul.addr %s752, 8
        %s754 = scalar_lea.vmem [#allocation13], %s753
        %s755 = sand.u32 %s37, 1
        %s756 = scalar_lea.sflag [#allocation15], %s755
        %s757 = sand.u32 %s338, 1
        %s758 = smul.addr %s757, 8
        %s759 = scalar_lea.vmem [#allocation14], %s758
        %s760 = sand.u32 %s37, 1
        %s761 = scalar_lea.sflag [#allocation15], %s760
        %s762 = sand.u32 %s368, 1
        %s763 = smul.addr %s762, 8
        %s764 = scalar_lea.vmem [#allocation16], %s763
        // Predicated region
        $region81: #{tpu_custom_call.1} parent=55 // pred_check
          %p765 = pneg %p318
        $region82: #{tpu_custom_call.1} parent=55 // pred_check_branch
          %767 = sbr.rel (%p765) target = $region84
        $region83: #{tpu_custom_call.1} parent=55 // pred_region
          %769 = vsyncadd %s751, 0
          %s770 = sadd.s32 %s44, %s43
          %s771 = sadd.s32 %s770, %s42
          %s772 = smul.addr %s771, 8
          %s773 = scalar_lea.hbm %s9, %s772
          %s775 = sshll.u32 %s754, 4
          %s776 = int_to_ptr.vmem [resolvable:$true] %s775
          %s777 = sshll.u32 %s773, 4
          %s778 = int_to_ptr.hbm [resolvable:$true] %s777
          %780 = dma.vmem_to_hbm [thread:$0]  %s776, 128, %s778, %s751
        $region84: #{tpu_custom_call.1} parent=55 // pred_fallthru
          _
        // Predicated region
        $region85: #{tpu_custom_call.1} parent=55 // pred_check
          %p781 = pneg %p348
        $region86: #{tpu_custom_call.1} parent=55 // pred_check_branch
          %783 = sbr.rel (%p781) target = $region88
        $region87: #{tpu_custom_call.1} parent=55 // pred_region
          %785 = vsyncadd %s756, 0
          %s786 = sadd.s32 %s44, %s43
          %s787 = sadd.s32 %s786, %s42
          %s788 = smul.addr %s787, 8
          %s789 = scalar_lea.hbm %s10, %s788
          %s791 = sshll.u32 %s759, 4
          %s792 = int_to_ptr.vmem [resolvable:$true] %s791
          %s793 = sshll.u32 %s789, 4
          %s794 = int_to_ptr.hbm [resolvable:$true] %s793
          %796 = dma.vmem_to_hbm [thread:$0]  %s792, 128, %s794, %s756
        $region88: #{tpu_custom_call.1} parent=55 // pred_fallthru
          _
        // Predicated region
        $region89: #{tpu_custom_call.1} parent=55 // pred_check
          %p797 = pneg %p378
        $region90: #{tpu_custom_call.1} parent=55 // pred_check_branch
          %799 = sbr.rel (%p797) target = $region92
        $region91: #{tpu_custom_call.1} parent=55 // pred_region
          %801 = vsyncadd %s761, 0
          %s802 = sadd.s32 %s44, %s43
          %s803 = sadd.s32 %s802, %s42
          %s804 = smul.addr %s803, 8
          %s805 = scalar_lea.hbm %s11, %s804
          %s807 = sshll.u32 %s764, 4
          %s808 = int_to_ptr.vmem [resolvable:$true] %s807
          %s809 = sshll.u32 %s805, 4
          %s810 = int_to_ptr.hbm [resolvable:$true] %s809
          %812 = dma.vmem_to_hbm [thread:$0]  %s808, 128, %s810, %s761
        $region92: #{tpu_custom_call.1} parent=55 // pred_fallthru
          _
      $region56: #{tpu_custom_call.1} parent=5 // pred_fallthru
        _
      %p813 = scmp.le.s32.totalorder 2, %s32
      // Predicated region
      $region93: #{tpu_custom_call.1} parent=5 // pred_check
        %p814 = pneg %p813
      $region94: #{tpu_custom_call.1} parent=5 // pred_check_branch
        %816 = sbr.rel (%p814) target = $region96
      $region95: #{tpu_custom_call.1} parent=5 // pred_region
        %s817 = ssub.s32 %s32, 2
        // Predicated region
        $region97: #{tpu_custom_call.1} parent=95 // pred_check
          %p818 = pneg %p324
        $region98: #{tpu_custom_call.1} parent=95 // pred_check_branch
          %820 = sbr.rel (%p818) target = $region100
        $region99: #{tpu_custom_call.1} parent=95 // pred_region
          %s821 = sand.u32 %s309, 1
          %s822 = scalar_lea.sflag [#allocation4], %s821
          %s823 = sand.u32 %s309, 1
          %s824 = smul.addr %s823, 8
          %s825 = scalar_lea.vmem [#allocation13], %s824
          %827 = dma.done %s822, 128
        $region100: #{tpu_custom_call.1} parent=95 // pred_fallthru
          _
        // Predicated region
        $region101: #{tpu_custom_call.1} parent=95 // pred_check
          %p828 = pneg %p354
        $region102: #{tpu_custom_call.1} parent=95 // pred_check_branch
          %830 = sbr.rel (%p828) target = $region104
        $region103: #{tpu_custom_call.1} parent=95 // pred_region
          %s831 = sand.u32 %s38, 1
          %s832 = scalar_lea.sflag [#allocation15], %s831
          %s833 = sand.u32 %s339, 1
          %s834 = smul.addr %s833, 8
          %s835 = scalar_lea.vmem [#allocation14], %s834
          %837 = dma.done %s832, 128
        $region104: #{tpu_custom_call.1} parent=95 // pred_fallthru
          _
        // Predicated region
        $region105: #{tpu_custom_call.1} parent=95 // pred_check
          %p838 = pneg %p384
        $region106: #{tpu_custom_call.1} parent=95 // pred_check_branch
          %840 = sbr.rel (%p838) target = $region108
        $region107: #{tpu_custom_call.1} parent=95 // pred_region
          %s841 = sand.u32 %s38, 1
          %s842 = scalar_lea.sflag [#allocation15], %s841
          %s843 = sand.u32 %s369, 1
          %s844 = smul.addr %s843, 8
          %s845 = scalar_lea.vmem [#allocation16], %s844
          %847 = dma.done %s842, 128
        $region108: #{tpu_custom_call.1} parent=95 // pred_fallthru
          _
      $region96: #{tpu_custom_call.1} parent=5 // pred_fallthru
        _
    $region6: #{tpu_custom_call.1} parent=1 // loop_footer
      %s36 = sadd.s32 1, %s32
    $region7: #{tpu_custom_call.1} parent=1 // loop_footer_branch
      %31 = sbr.rel target = $region3
    $region8: #{tpu_custom_call.1} parent=1 // loop_exit
      _
    %848 = vsyncpa [#allocation3], 1
    %s849 = scalar_lea.sflag [#allocation3], 1
    %850 = vsyncpa %s849, 1
    %851 = vsyncpa [#allocation6], 1
    %s852 = scalar_lea.sflag [#allocation6], 1
    %853 = vsyncpa %s852, 1
    %854 = vsyncpa [#allocation9], 1
    %855 = vsyncpa [#allocation12], 1
    %856 = vsyncpa [#allocation4], 1
    %s857 = scalar_lea.sflag [#allocation4], 1
    %858 = vsyncpa %s857, 1
    %859 = vsyncpa [#allocation15], 1
    %s860 = scalar_lea.sflag [#allocation15], 1
    %861 = vsyncpa %s860, 1

</llo_original>
